<compile_context>
chip_gen: v7x
topology: tpu7x:2x2x1
jax: 0.10.0
libtpu: 0.0.40
codegen_flags: <defaults>
</compile_context>

<pallas_src>
import jax
import jax.numpy as jnp
from jax.experimental import pallas as pl
from jax.experimental.pallas import tpu as pltpu

N_IN = 5 + 4 * 3 * 2   # 29
N_MID = 32
N_OUT = 32
N_HEAD_BLK = 4         # per-row head columns: [d, d, v, 0]  (d = pi1 - pi0 logit diff)


def _round_up(n, m):
    return ((n + m - 1) // m) * m


def _default_replication():
    """Block-diagonal replication factor R: fill the MXU N dimension.
    128x128 MXU chips (<= v5) -> 4x (128-wide); 256x256 MXU (v6e/v7x) -> 8x."""
    try:
        kind = jax.devices()[0].device_kind.lower()
    except Exception:
        return 8
    for tag in ("v2", "v3", "v4", "v5"):
        if tag in kind:
            return 4
    return 8


def _block_diag(w, r):
    rows, cols = w.shape
    out = jnp.zeros((rows * r, cols * r), w.dtype)
    for i in range(r):
        out = out.at[i * rows:(i + 1) * rows, i * cols:(i + 1) * cols].set(w)
    return out


def _xavier_uniform(key, fan_in, fan_out, dtype=jnp.float32):
    limit = jnp.sqrt(6.0 / (fan_in + fan_out)).astype(dtype)
    return jax.random.uniform(key, (fan_in, fan_out), dtype,
                              minval=-limit, maxval=limit)


def init_params(seed=0):
    """f32 'PyTorch-equivalent' parameters (xavier_uniform weights, zero bias).
    Weights stored [in, out] so the math is x @ W (== PyTorch x @ W.T)."""
    key = jax.random.PRNGKey(seed)
    k1, k2, k3, kpi, kv = jax.random.split(key, 5)
    return {
        "w1": _xavier_uniform(k1, N_IN, N_MID),
        "b1": jnp.zeros((1, N_MID), jnp.float32),
        "w2": _xavier_uniform(k2, N_MID, N_MID),
        "b2": jnp.zeros((1, N_MID), jnp.float32),
        "w3": _xavier_uniform(k3, N_MID, N_OUT),
        "b3": jnp.zeros((1, N_OUT), jnp.float32),
        "wpi": _xavier_uniform(kpi, N_OUT, 2),
        "bpi": jnp.zeros((1, 2), jnp.float32),
        "wv": _xavier_uniform(kv, N_OUT, 1),
        "bv": jnp.zeros((1, 1), jnp.float32),
    }


def pack_params(params, replication=None, compute_dtype=jnp.bfloat16):
    """Fuse heads + block-diagonal-replicate weights R times (lane density).

    Head block per logical row has 4 columns: [d, d, v, 0] with
    d = Pi-logit(1) - Pi-logit(0), so softmax reduces to a sigmoid.
    Matmul operands are cast to `compute_dtype` (bf16); biases stay f32.
    """
    r = int(replication) if replication is not None else _default_replication()
    wd = params["wpi"][:, 1:2] - params["wpi"][:, 0:1]     # (32, 1)
    bd = params["bpi"][:, 1:2] - params["bpi"][:, 0:1]     # (1, 1)
    wh_blk = jnp.concatenate(
        [wd, wd, params["wv"], jnp.zeros_like(params["wv"])], axis=1)  # (32, 4)
    bh_blk = jnp.concatenate(
        [bd, bd, params["bv"], jnp.zeros_like(params["bv"])], axis=1)  # (1, 4)
    return {
        "w1": _block_diag(params["w1"], r).astype(compute_dtype),   # (29R, 32R)
        "b1": jnp.tile(params["b1"], (1, r)).astype(jnp.float32),   # (1, 32R)
        "w2": _block_diag(params["w2"], r).astype(compute_dtype),   # (32R, 32R)
        "b2": jnp.tile(params["b2"], (1, r)).astype(jnp.float32),
        "w3": _block_diag(params["w3"], r).astype(compute_dtype),   # (32R, 32R)
        "b3": jnp.tile(params["b3"], (1, r)).astype(jnp.float32),
        "wh": _block_diag(wh_blk, r).astype(compute_dtype),         # (32R, 4R)
        "bh": jnp.tile(bh_blk, (1, r)).astype(jnp.float32),         # (1, 4R)
    }


def actor_critic_kernel(x_ref, w1_ref, b1_ref, w2_ref, b2_ref, w3_ref, b3_ref,
                        wh_ref, bh_ref, out_ref):
    """One batch tile.  x_ref: (tb/R, 29R) f32 (R logical rows packed per lane
    row); weights are block-diagonal bf16; out_ref: (tb/R, 4R) f32."""
    cdt = w1_ref.dtype  # bf16 matmul-operand dtype

    # fc1 + ReLU (bf16 operands, f32 MXU accumulate; bias/ReLU in f32)
    h = jnp.dot(x_ref[...].astype(cdt), w1_ref[...],
                preferred_element_type=jnp.float32) + b1_ref[...]
    h = jnp.maximum(h, 0.0)

    # fc2 + ReLU
    h = jnp.dot(h.astype(cdt), w2_ref[...],
                preferred_element_type=jnp.float32) + b2_ref[...]
    h = jnp.maximum(h, 0.0)

    # fc3 + ReLU
    h = jnp.dot(h.astype(cdt), w3_ref[...],
                preferred_element_type=jnp.float32) + b3_ref[...]
    h = jnp.maximum(h, 0.0)

    # Fused head: per logical row the 4 columns are [d, d, v, 0].
    head = jnp.dot(h.astype(cdt), wh_ref[...],
                   preferred_element_type=jnp.float32) + bh_ref[...]

    # 2-class softmax via numerically stable sigmoid(d): never exp(>0).
    e = jnp.exp(-jnp.abs(head))
    p_small = e / (1.0 + e)
    sig = jnp.where(head >= 0.0, 1.0 - p_small, p_small)   # sigmoid(head)

    # Output columns per logical row: [p0, p1, v, 0]
    col = jax.lax.broadcasted_iota(jnp.int32, head.shape, 1) & 3
    out_ref[...] = jnp.where(col == 0, 1.0 - sig,
                   jnp.where(col == 1, sig,
                   jnp.where(col == 2, head, 0.0)))


def actor_critic_forward(x, kernel_params, tile_b=8192):
    """x: (B, 29) f32.  Returns (prob (B, 2) f32, value (B, 1) f32).

    Call under jax.jit so the row-pad (when needed), the free reshapes and the
    final prob/value slices stay fused around the pallas_call.
    """
    kp = kernel_params
    R = kp["b1"].shape[1] // N_MID          # replication factor (from shapes)
    B = x.shape[0]
    x = x.astype(jnp.float32)

    # Row padding only to the sublane granularity of the packed view (8*R),
    # batch tile default 8192 rows (amortizes the ~0.35us per-step overhead),
    # and keep >=2 grid steps when the batch allows (v7x has 2 TensorCores).
    row_align = 8 * R
    b_al = _round_up(B, row_align)
    tb = max(row_align, min(_round_up(tile_b, row_align), b_al))
    if b_al // tb < 2 and b_al >= 2 * row_align:
        tb = _round_up((b_al + 1) // 2, row_align)
    b_pad = _round_up(b_al, tb)
    grid = (b_pad // tb,)

    if b_pad != B:                            # only when B is not tile-aligned
        x_p = jnp.zeros((b_pad, N_IN), jnp.float32).at[:B].set(x)
    else:
        x_p = x
    # Free (byte-identical) view: R logical rows per packed row -> lane-dense.
    x_r = x_p.reshape(b_pad // R, N_IN * R)

    nh = N_HEAD_BLK * R
    flops_per_row = 2 * (N_IN * N_MID + N_MID * N_MID + N_MID * N_OUT
                         + N_OUT * N_HEAD_BLK)
    param_bytes = sum(int(v.size) * int(v.dtype.itemsize) for v in kp.values())
    cost = pl.CostEstimate(
        flops=int(b_pad) * flops_per_row,
        transcendentals=int(b_pad) * N_HEAD_BLK,
        bytes_accessed=int(b_pad) * (N_IN + N_HEAD_BLK) * 4 + param_bytes,
    )

    const = lambda i: (0, 0)   # params stay VMEM-resident across grid steps
    out = pl.pallas_call(
        actor_critic_kernel,
        out_shape=jax.ShapeDtypeStruct((b_pad // R, nh), jnp.float32),
        grid=grid,
        in_specs=[
            pl.BlockSpec((tb // R, N_IN * R), lambda i: (i, 0)),   # x tile (f32, pipelined)
            pl.BlockSpec((N_IN * R, N_MID * R), const),            # w1 block-diag
            pl.BlockSpec((1, N_MID * R), const),                   # b1
            pl.BlockSpec((N_MID * R, N_MID * R), const),           # w2
            pl.BlockSpec((1, N_MID * R), const),                   # b2
            pl.BlockSpec((N_MID * R, N_OUT * R), const),           # w3
            pl.BlockSpec((1, N_OUT * R), const),                   # b3
            pl.BlockSpec((N_OUT * R, nh), const),                  # fused head weight
            pl.BlockSpec((1, nh), const),                          # fused head bias
        ],
        out_specs=pl.BlockSpec((tb // R, nh), lambda i: (i, 0)),
        compiler_params=pltpu.CompilerParams(
            dimension_semantics=("parallel",),
            vmem_limit_bytes=32 * 1024 * 1024,   # safe on v5e/v6e/v7x; usage << this
        ),
        cost_estimate=cost,
    )(x_r, kp["w1"], kp["b1"], kp["w2"], kp["b2"], kp["w3"], kp["b3"],
      kp["wh"], kp["bh"])

    out2 = out.reshape(b_pad, N_HEAD_BLK)     # free view back to per-row layout
    prob = out2[:B, 0:2]
    value = out2[:B, 2:3]
    return prob, value


def reference_forward_f32(x, params):
    """Pure f32 PyTorch-equivalent math."""
    h = jnp.maximum(x @ params["w1"] + params["b1"], 0.0)
    h = jnp.maximum(h @ params["w2"] + params["b2"], 0.0)
    h = jnp.maximum(h @ params["w3"] + params["b3"], 0.0)
    prob = jax.nn.softmax(h @ params["wpi"] + params["bpi"], axis=-1)
    value = h @ params["wv"] + params["bv"]
    return prob, value


def reference_forward_packed(x, kp):
    """Mirror of the kernel's quantized path: same bf16 weights (first
    diagonal block), f32 accumulate, sigmoid-of-difference head."""
    cdt = kp["w1"].dtype
    w1, b1 = kp["w1"][:N_IN, :N_MID], kp["b1"][:, :N_MID]
    w2, b2 = kp["w2"][:N_MID, :N_MID], kp["b2"][:, :N_MID]
    w3, b3 = kp["w3"][:N_MID, :N_OUT], kp["b3"][:, :N_OUT]
    wh, bh = kp["wh"][:N_OUT, :N_HEAD_BLK], kp["bh"][:, :N_HEAD_BLK]
    h = jnp.maximum(jnp.dot(x.astype(cdt), w1,
                            preferred_element_type=jnp.float32) + b1, 0.0)
    h = jnp.maximum(jnp.dot(h.astype(cdt), w2,
                            preferred_element_type=jnp.float32) + b2, 0.0)
    h = jnp.maximum(jnp.dot(h.astype(cdt), w3,
                            preferred_element_type=jnp.float32) + b3, 0.0)
    head = jnp.dot(h.astype(cdt), wh, preferred_element_type=jnp.float32) + bh
    p1 = jax.nn.sigmoid(head[:, 0:1])
    prob = jnp.concatenate([1.0 - p1, p1], axis=1)
    value = head[:, 2:3]
    return prob, value


if __name__ == "__main__":
    key = jax.random.PRNGKey(0)
    B = 8
    x = jax.random.normal(key, (B, N_IN), jnp.float32)
    params = init_params(seed=0)
    kp = pack_params(params)

    fwd = jax.jit(actor_critic_forward)
    prob, value = fwd(x, kp)
    jax.block_until_ready((prob, value))

    assert prob.shape == (B, 2) and value.shape == (B, 1)

    # Tight check vs a reference using the same bf16-operand / f32-accumulate path.
    prob_q, value_q = reference_forward_packed(x, kp)
    assert jnp.allclose(prob, prob_q, atol=1e-3, rtol=1e-3)
    assert jnp.allclose(value, value_q, atol=1e-3, rtol=1e-3)

    # Loose check vs the pure-f32 PyTorch-equivalent math (bf16 operand error only).
    prob_f, value_f = reference_forward_f32(x, params)
    assert jnp.allclose(prob, prob_f, atol=1e-1, rtol=1e-1)
    assert jnp.allclose(value, value_f, atol=1e-1, rtol=1e-1)

    # softmax rows sum to 1
    assert jnp.allclose(jnp.sum(prob, axis=-1), jnp.ones((B,)), atol=1e-5)

    print("KERNEL_OK")
</pallas_src>

<mosaic_0001>
module attributes {stable_mosaic.version = 11 : i64} {
  func.func @actor_critic_kernel(%arg0: i32, %arg1: memref<8x232xf32, #tpu.memory_space<vmem>>, %arg2: memref<232x256xbf16, #tpu.memory_space<vmem>>, %arg3: memref<1x256xf32, #tpu.memory_space<vmem>>, %arg4: memref<256x256xbf16, #tpu.memory_space<vmem>>, %arg5: memref<1x256xf32, #tpu.memory_space<vmem>>, %arg6: memref<256x256xbf16, #tpu.memory_space<vmem>>, %arg7: memref<1x256xf32, #tpu.memory_space<vmem>>, %arg8: memref<256x32xbf16, #tpu.memory_space<vmem>>, %arg9: memref<1x32xf32, #tpu.memory_space<vmem>>, %arg10: memref<8x32xf32, #tpu.memory_space<vmem>>) attributes {dimension_semantics = [#tpu.dimension_semantics<parallel>], iteration_bounds = array<i64: 1>, scalar_prefetch = 0 : i64, scratch_operands = 0 : i64, tpu.core_type = #tpu.core_type<tc>, window_params = [{transform_indices = @transform_0, window_bounds = array<i64: 8, 232>}, {pipeline_mode = #tpu.pipeline_mode<synchronous>, transform_indices = @transform_1, window_bounds = array<i64: 232, 256>}, {pipeline_mode = #tpu.pipeline_mode<synchronous>, transform_indices = @transform_2, window_bounds = array<i64: 1, 256>}, {pipeline_mode = #tpu.pipeline_mode<synchronous>, transform_indices = @transform_3, window_bounds = array<i64: 256, 256>}, {pipeline_mode = #tpu.pipeline_mode<synchronous>, transform_indices = @transform_4, window_bounds = array<i64: 1, 256>}, {pipeline_mode = #tpu.pipeline_mode<synchronous>, transform_indices = @transform_5, window_bounds = array<i64: 256, 256>}, {pipeline_mode = #tpu.pipeline_mode<synchronous>, transform_indices = @transform_6, window_bounds = array<i64: 1, 256>}, {pipeline_mode = #tpu.pipeline_mode<synchronous>, transform_indices = @transform_7, window_bounds = array<i64: 256, 32>}, {pipeline_mode = #tpu.pipeline_mode<synchronous>, transform_indices = @transform_8, window_bounds = array<i64: 1, 32>}, {transform_indices = @transform_9, window_bounds = array<i64: 8, 32>}]} {
    %c0 = arith.constant 0 : index
    %c0_0 = arith.constant 0 : index
    %0 = vector.load %arg1[%c0, %c0_0] : memref<8x232xf32, #tpu.memory_space<vmem>>, vector<8x232xf32>
    %1 = arith.truncf %0 : vector<8x232xf32> to vector<8x232xbf16>
    %c0_1 = arith.constant 0 : index
    %c0_2 = arith.constant 0 : index
    %2 = vector.load %arg2[%c0_1, %c0_2] : memref<232x256xbf16, #tpu.memory_space<vmem>>, vector<232x256xbf16>
    %cst = arith.constant dense<0.000000e+00> : vector<8x256xf32>
    %3 = tpu.matmul %1, %2, %cst {dimension_numbers = #tpu.dot_dimension_numbers<[1], [0], [0], [1], [0, 0, 1, 1], [], []>} : vector<8x232xbf16>, vector<232x256xbf16>, vector<8x256xf32> -> vector<8x256xf32>
    %c0_3 = arith.constant 0 : index
    %c0_4 = arith.constant 0 : index
    %4 = vector.load %arg3[%c0_3, %c0_4] : memref<1x256xf32, #tpu.memory_space<vmem>>, vector<1x256xf32>
    %5 = vector.broadcast %4 : vector<1x256xf32> to vector<8x256xf32>
    %6 = arith.addf %3, %5 : vector<8x256xf32>
    %cst_5 = arith.constant 0.000000e+00 : f32
    %7 = vector.broadcast %cst_5 : f32 to vector<8x256xf32>
    %8 = arith.maximumf %6, %7 : vector<8x256xf32>
    %9 = arith.truncf %8 : vector<8x256xf32> to vector<8x256xbf16>
    %c0_6 = arith.constant 0 : index
    %c0_7 = arith.constant 0 : index
    %10 = vector.load %arg4[%c0_6, %c0_7] : memref<256x256xbf16, #tpu.memory_space<vmem>>, vector<256x256xbf16>
    %cst_8 = arith.constant dense<0.000000e+00> : vector<8x256xf32>
    %11 = tpu.matmul %9, %10, %cst_8 {dimension_numbers = #tpu.dot_dimension_numbers<[1], [0], [0], [1], [0, 0, 1, 1], [], []>} : vector<8x256xbf16>, vector<256x256xbf16>, vector<8x256xf32> -> vector<8x256xf32>
    %c0_9 = arith.constant 0 : index
    %c0_10 = arith.constant 0 : index
    %12 = vector.load %arg5[%c0_9, %c0_10] : memref<1x256xf32, #tpu.memory_space<vmem>>, vector<1x256xf32>
    %13 = vector.broadcast %12 : vector<1x256xf32> to vector<8x256xf32>
    %14 = arith.addf %11, %13 : vector<8x256xf32>
    %cst_11 = arith.constant 0.000000e+00 : f32
    %15 = vector.broadcast %cst_11 : f32 to vector<8x256xf32>
    %16 = arith.maximumf %14, %15 : vector<8x256xf32>
    %17 = arith.truncf %16 : vector<8x256xf32> to vector<8x256xbf16>
    %c0_12 = arith.constant 0 : index
    %c0_13 = arith.constant 0 : index
    %18 = vector.load %arg6[%c0_12, %c0_13] : memref<256x256xbf16, #tpu.memory_space<vmem>>, vector<256x256xbf16>
    %cst_14 = arith.constant dense<0.000000e+00> : vector<8x256xf32>
    %19 = tpu.matmul %17, %18, %cst_14 {dimension_numbers = #tpu.dot_dimension_numbers<[1], [0], [0], [1], [0, 0, 1, 1], [], []>} : vector<8x256xbf16>, vector<256x256xbf16>, vector<8x256xf32> -> vector<8x256xf32>
    %c0_15 = arith.constant 0 : index
    %c0_16 = arith.constant 0 : index
    %20 = vector.load %arg7[%c0_15, %c0_16] : memref<1x256xf32, #tpu.memory_space<vmem>>, vector<1x256xf32>
    %21 = vector.broadcast %20 : vector<1x256xf32> to vector<8x256xf32>
    %22 = arith.addf %19, %21 : vector<8x256xf32>
    %cst_17 = arith.constant 0.000000e+00 : f32
    %23 = vector.broadcast %cst_17 : f32 to vector<8x256xf32>
    %24 = arith.maximumf %22, %23 : vector<8x256xf32>
    %25 = arith.truncf %24 : vector<8x256xf32> to vector<8x256xbf16>
    %c0_18 = arith.constant 0 : index
    %c0_19 = arith.constant 0 : index
    %26 = vector.load %arg8[%c0_18, %c0_19] : memref<256x32xbf16, #tpu.memory_space<vmem>>, vector<256x32xbf16>
    %cst_20 = arith.constant dense<0.000000e+00> : vector<8x32xf32>
    %27 = tpu.matmul %25, %26, %cst_20 {dimension_numbers = #tpu.dot_dimension_numbers<[1], [0], [0], [1], [0, 0, 1, 1], [], []>} : vector<8x256xbf16>, vector<256x32xbf16>, vector<8x32xf32> -> vector<8x32xf32>
    %c0_21 = arith.constant 0 : index
    %c0_22 = arith.constant 0 : index
    %28 = vector.load %arg9[%c0_21, %c0_22] : memref<1x32xf32, #tpu.memory_space<vmem>>, vector<1x32xf32>
    %29 = vector.broadcast %28 : vector<1x32xf32> to vector<8x32xf32>
    %30 = arith.addf %27, %29 : vector<8x32xf32>
    %31 = math.absf %30 : vector<8x32xf32>
    %cst_23 = arith.constant 0.000000e+00 : f32
    %32 = vector.broadcast %cst_23 : f32 to vector<8x32xf32>
    %33 = arith.subf %32, %31 : vector<8x32xf32>
    %34 = math.exp %33 : vector<8x32xf32>
    %cst_24 = arith.constant 1.000000e+00 : f32
    %35 = vector.broadcast %cst_24 : f32 to vector<8x32xf32>
    %36 = arith.addf %35, %34 : vector<8x32xf32>
    %37 = arith.divf %34, %36 : vector<8x32xf32>
    %cst_25 = arith.constant 0.000000e+00 : f32
    %38 = vector.broadcast %cst_25 : f32 to vector<8x32xf32>
    %39 = arith.cmpf oge, %30, %38 : vector<8x32xf32>
    %cst_26 = arith.constant 1.000000e+00 : f32
    %40 = vector.broadcast %cst_26 : f32 to vector<8x32xf32>
    %41 = arith.subf %40, %37 : vector<8x32xf32>
    %42 = arith.select %39, %41, %37 : vector<8x32xi1>, vector<8x32xf32>
    %43 = tpu.iota {dimensions = array<i32: 1>} : vector<8x32xi32>
    %c3_i32 = arith.constant 3 : i32
    %44 = vector.broadcast %c3_i32 : i32 to vector<8x32xi32>
    %45 = arith.andi %43, %44 : vector<8x32xi32>
    %c0_i32 = arith.constant 0 : i32
    %46 = vector.broadcast %c0_i32 : i32 to vector<8x32xi32>
    %47 = arith.cmpi eq, %45, %46 : vector<8x32xi32>
    %cst_27 = arith.constant 1.000000e+00 : f32
    %48 = vector.broadcast %cst_27 : f32 to vector<8x32xf32>
    %49 = arith.subf %48, %42 : vector<8x32xf32>
    %c1_i32 = arith.constant 1 : i32
    %50 = vector.broadcast %c1_i32 : i32 to vector<8x32xi32>
    %51 = arith.cmpi eq, %45, %50 : vector<8x32xi32>
    %c2_i32 = arith.constant 2 : i32
    %52 = vector.broadcast %c2_i32 : i32 to vector<8x32xi32>
    %53 = arith.cmpi eq, %45, %52 : vector<8x32xi32>
    %cst_28 = arith.constant 0.000000e+00 : f32
    %54 = vector.broadcast %cst_28 : f32 to vector<8x32xf32>
    %55 = arith.select %53, %30, %54 : vector<8x32xi1>, vector<8x32xf32>
    %56 = arith.select %51, %42, %55 : vector<8x32xi1>, vector<8x32xf32>
    %57 = arith.select %47, %49, %56 : vector<8x32xi1>, vector<8x32xf32>
    %c0_29 = arith.constant 0 : index
    %c0_30 = arith.constant 0 : index
    %58 = vector.load %arg10[%c0_29, %c0_30] : memref<8x32xf32, #tpu.memory_space<vmem>>, vector<8x32xf32>
    tpu.vector_store %arg10[%c0_29, %c0_30], %57 {strides = array<i32>} : memref<8x32xf32, #tpu.memory_space<vmem>>, vector<8x32xf32>,
    return
  }
  func.func @transform_0(%arg0: i32) -> (i32, i32) {
    %c0_i32 = arith.constant 0 : i32
    %c0_i32_0 = arith.constant 0 : i32
    return %arg0, %c0_i32 : i32, i32
  }
  func.func @transform_1(%arg0: i32) -> (i32, i32) {
    %c0_i32 = arith.constant 0 : i32
    %c0_i32_0 = arith.constant 0 : i32
    %c0_i32_1 = arith.constant 0 : i32
    return %c0_i32, %c0_i32_0 : i32, i32
  }
  func.func @transform_2(%arg0: i32) -> (i32, i32) {
    %c0_i32 = arith.constant 0 : i32
    %c0_i32_0 = arith.constant 0 : i32
    %c0_i32_1 = arith.constant 0 : i32
    return %c0_i32, %c0_i32_0 : i32, i32
  }
  func.func @transform_3(%arg0: i32) -> (i32, i32) {
    %c0_i32 = arith.constant 0 : i32
    %c0_i32_0 = arith.constant 0 : i32
    %c0_i32_1 = arith.constant 0 : i32
    return %c0_i32, %c0_i32_0 : i32, i32
  }
  func.func @transform_4(%arg0: i32) -> (i32, i32) {
    %c0_i32 = arith.constant 0 : i32
    %c0_i32_0 = arith.constant 0 : i32
    %c0_i32_1 = arith.constant 0 : i32
    return %c0_i32, %c0_i32_0 : i32, i32
  }
  func.func @transform_5(%arg0: i32) -> (i32, i32) {
    %c0_i32 = arith.constant 0 : i32
    %c0_i32_0 = arith.constant 0 : i32
    %c0_i32_1 = arith.constant 0 : i32
    return %c0_i32, %c0_i32_0 : i32, i32
  }
  func.func @transform_6(%arg0: i32) -> (i32, i32) {
    %c0_i32 = arith.constant 0 : i32
    %c0_i32_0 = arith.constant 0 : i32
    %c0_i32_1 = arith.constant 0 : i32
    return %c0_i32, %c0_i32_0 : i32, i32
  }
  func.func @transform_7(%arg0: i32) -> (i32, i32) {
    %c0_i32 = arith.constant 0 : i32
    %c0_i32_0 = arith.constant 0 : i32
    %c0_i32_1 = arith.constant 0 : i32
    return %c0_i32, %c0_i32_0 : i32, i32
  }
  func.func @transform_8(%arg0: i32) -> (i32, i32) {
    %c0_i32 = arith.constant 0 : i32
    %c0_i32_0 = arith.constant 0 : i32
    %c0_i32_1 = arith.constant 0 : i32
    return %c0_i32, %c0_i32_0 : i32, i32
  }
  func.func @transform_9(%arg0: i32) -> (i32, i32) {
    %c0_i32 = arith.constant 0 : i32
    %c0_i32_0 = arith.constant 0 : i32
    return %arg0, %c0_i32 : i32, i32
  }
}

</mosaic_0001>

<llo_original>
// kernel: actor_critic_forward.1
$region0: #{actor_critic_forward.1}
  #allocation0 [shape = 'u32[]', space=smem, size = 0x4, offset = 0x4, fixed_abs, tag = 'smem constant byte address 0x4 - core index']
  #allocation1 [shape = 'u32[144,128]{1,0:T(1,128)}', space=vmem, size = 0x12000, scoped, tag = 'internal scratch']
  %s0 = inlined_call_operand.vmem [shape: f32[8,232], index: 0, kind: input, shape index: {}]
  %s1 = inlined_call_operand.hbm [shape: bf16[232,256], index: 1, kind: input, shape index: {}]
  %s2 = inlined_call_operand.vmem [shape: f32[1,256], index: 2, kind: input, shape index: {}]
  %s3 = inlined_call_operand.vmem [shape: bf16[256,256], index: 3, kind: input, shape index: {}]
  %s4 = inlined_call_operand.vmem [shape: f32[1,256], index: 4, kind: input, shape index: {}]
  %s5 = inlined_call_operand.hbm [shape: bf16[256,256], index: 5, kind: input, shape index: {}]
  %s6 = inlined_call_operand.vmem [shape: f32[1,256], index: 6, kind: input, shape index: {}]
  %s7 = inlined_call_operand.vmem [shape: bf16[256,32], index: 7, kind: input, shape index: {}]
  %s8 = inlined_call_operand.vmem [shape: f32[1,32], index: 8, kind: input, shape index: {}]
  %s9 = inlined_call_operand.vmem [shape: f32[8,32], index: 9, kind: output, shape index: {}]
  %s10 = sld [smem:[#allocation0]]
  $region54: #{actor_critic_forward.1} parent=0
    _
  %s12 = ssub.s32 1, %s10
  %s13 = scalar_select 0, %s12, %s10
  $region1: #{actor_critic_forward.1} parent=0
    #allocation2 [shape = 'u8[118784]{0}', space=vmem, size = 0x1d000, scoped, tag = 'input window, operand 1, single buffered']
    #allocation3 [shape = 's32[1]{0}', space=sflag, size = 0x4, scoped, tag = 'scoped memory for actor_critic_forward.1']
    #allocation4 [shape = 'u8[131072]{0}', space=vmem, size = 0x20000, scoped, tag = 'input window, operand 5, single buffered']
    #allocation5 [shape = 's32[1]{0}', space=sflag, size = 0x4, scoped, tag = 'scoped memory for actor_critic_forward.1']
    %14 = vsyncpa [#allocation3], 0
    %15 = vsyncpa [#allocation5], 0
    // Predicated region
    $region2: #{actor_critic_forward.1} parent=1 // pred_check
      _
    $region3: #{actor_critic_forward.1} parent=1 // pred_check_branch
      %17 = sbr.rel (0) target = $region5
    $region4: #{actor_critic_forward.1} parent=1 // pred_region
      _
    $region5: #{actor_critic_forward.1} parent=1 // pred_fallthru
      _
    // Predicated region
    $region6: #{actor_critic_forward.1} parent=1 // pred_check
      _
    $region7: #{actor_critic_forward.1} parent=1 // pred_check_branch
      %19 = sbr.rel (0) target = $region9
    $region8: #{actor_critic_forward.1} parent=1 // pred_region
      %s21 = ssub.s32 3712, 3712
      %22 = vsyncadd [#allocation3], %s21
      %s23 = sshll.u32 [#allocation2], 4
      %s24 = int_to_ptr.vmem [resolvable:$true] %s23
      %29 = dma.hbm_to_vmem [thread:$0]  %s1, 3712, %s24, [#allocation3], 128, 128, 8
    $region9: #{actor_critic_forward.1} parent=1 // pred_fallthru
      _
    // Predicated region
    $region10: #{actor_critic_forward.1} parent=1 // pred_check
      _
    $region11: #{actor_critic_forward.1} parent=1 // pred_check_branch
      %31 = sbr.rel (0) target = $region13
    $region12: #{actor_critic_forward.1} parent=1 // pred_region
      _
    $region13: #{actor_critic_forward.1} parent=1 // pred_fallthru
      _
    // Predicated region
    $region14: #{actor_critic_forward.1} parent=1 // pred_check
      _
    $region15: #{actor_critic_forward.1} parent=1 // pred_check_branch
      %33 = sbr.rel (0) target = $region17
    $region16: #{actor_critic_forward.1} parent=1 // pred_region
      _
    $region17: #{actor_critic_forward.1} parent=1 // pred_fallthru
      _
    // Predicated region
    $region18: #{actor_critic_forward.1} parent=1 // pred_check
      _
    $region19: #{actor_critic_forward.1} parent=1 // pred_check_branch
      %35 = sbr.rel (0) target = $region21
    $region20: #{actor_critic_forward.1} parent=1 // pred_region
      _
    $region21: #{actor_critic_forward.1} parent=1 // pred_fallthru
      _
    // Predicated region
    $region22: #{actor_critic_forward.1} parent=1 // pred_check
      _
    $region23: #{actor_critic_forward.1} parent=1 // pred_check_branch
      %37 = sbr.rel (0) target = $region25
    $region24: #{actor_critic_forward.1} parent=1 // pred_region
      %s39 = ssub.s32 4096, 4096
      %40 = vsyncadd [#allocation5], %s39
      %s41 = sshll.u32 [#allocation4], 4
      %s42 = int_to_ptr.vmem [resolvable:$true] %s41
      %47 = dma.hbm_to_vmem [thread:$0]  %s5, 4096, %s42, [#allocation5], 128, 128, 8
    $region25: #{actor_critic_forward.1} parent=1 // pred_fallthru
      _
    // Predicated region
    $region26: #{actor_critic_forward.1} parent=1 // pred_check
      _
    $region27: #{actor_critic_forward.1} parent=1 // pred_check_branch
      %49 = sbr.rel (0) target = $region29
    $region28: #{actor_critic_forward.1} parent=1 // pred_region
      _
    $region29: #{actor_critic_forward.1} parent=1 // pred_fallthru
      _
    // Predicated region
    $region30: #{actor_critic_forward.1} parent=1 // pred_check
      _
    $region31: #{actor_critic_forward.1} parent=1 // pred_check_branch
      %51 = sbr.rel (0) target = $region33
    $region32: #{actor_critic_forward.1} parent=1 // pred_region
      _
    $region33: #{actor_critic_forward.1} parent=1 // pred_fallthru
      _
    // Predicated region
    $region34: #{actor_critic_forward.1} parent=1 // pred_check
      _
    $region35: #{actor_critic_forward.1} parent=1 // pred_check_branch
      %53 = sbr.rel (0) target = $region37
    $region36: #{actor_critic_forward.1} parent=1 // pred_region
      _
    $region37: #{actor_critic_forward.1} parent=1 // pred_fallthru
      _
    // Predicated region
    $region38: #{actor_critic_forward.1} parent=1 // pred_check
      _
    $region39: #{actor_critic_forward.1} parent=1 // pred_check_branch
      %55 = sbr.rel (0) target = $region41
    $region40: #{actor_critic_forward.1} parent=1 // pred_region
      %56 = dma.done [#allocation3], 3712
    $region41: #{actor_critic_forward.1} parent=1 // pred_fallthru
      _
    // Predicated region
    $region42: #{actor_critic_forward.1} parent=1 // pred_check
      _
    $region43: #{actor_critic_forward.1} parent=1 // pred_check_branch
      %58 = sbr.rel (0) target = $region45
    $region44: #{actor_critic_forward.1} parent=1 // pred_region
      %59 = dma.done [#allocation5], 4096
    $region45: #{actor_critic_forward.1} parent=1 // pred_fallthru
      _
    %v61 = vld [vmem:[%s0] sm:$0xff]
    %v62 = vld [vmem:[%s0 + $0x8] sm:$0xff]
    %v63 = vpack.c.bf16 %v61, %v61
    %v64 = vpack.c.bf16 %v62, %v62
    %v65 = vld [vmem:[#allocation2] sm:$0xff]
    %v66 = vld [vmem:[#allocation2 + $0x8] sm:$0xff]
    %v67 = vld [vmem:[#allocation2 + $0x10] sm:$0xff]
    %v68 = vld [vmem:[#allocation2 + $0x18] sm:$0xff]
    %v69 = vld [vmem:[#allocation2 + $0x20] sm:$0xff]
    %v70 = vld [vmem:[#allocation2 + $0x28] sm:$0xff]
    %v71 = vld [vmem:[#allocation2 + $0x30] sm:$0xff]
    %v72 = vld [vmem:[#allocation2 + $0x38] sm:$0xff]
    %v73 = vld [vmem:[#allocation2 + $0x40] sm:$0xff]
    %v74 = vld [vmem:[#allocation2 + $0x48] sm:$0xff]
    %v75 = vld [vmem:[#allocation2 + $0x50] sm:$0xff]
    %v76 = vld [vmem:[#allocation2 + $0x58] sm:$0xff]
    %v77 = vld [vmem:[#allocation2 + $0x60] sm:$0xff]
    %v78 = vld [vmem:[#allocation2 + $0x68] sm:$0xff]
    %v79 = vld [vmem:[#allocation2 + $0x70] sm:$0xff]
    %v80 = vld [vmem:[#allocation2 + $0x78] sm:$0xff]
    %v81 = vld [vmem:[#allocation2 + $0x80] sm:$0xff]
    %v82 = vld [vmem:[#allocation2 + $0x88] sm:$0xff]
    %v83 = vld [vmem:[#allocation2 + $0x90] sm:$0xff]
    %v84 = vld [vmem:[#allocation2 + $0x98] sm:$0xff]
    %v85 = vld [vmem:[#allocation2 + $0xa0] sm:$0xff]
    %v86 = vld [vmem:[#allocation2 + $0xa8] sm:$0xff]
    %v87 = vld [vmem:[#allocation2 + $0xb0] sm:$0xff]
    %v88 = vld [vmem:[#allocation2 + $0xb8] sm:$0xff]
    %v89 = vld [vmem:[#allocation2 + $0xc0] sm:$0xff]
    %v90 = vld [vmem:[#allocation2 + $0xc8] sm:$0xff]
    %v91 = vld [vmem:[#allocation2 + $0xd0] sm:$0xff]
    %v92 = vld [vmem:[#allocation2 + $0xd8] sm:$0xff]
    %v93 = vld [vmem:[#allocation2 + $0xe0] sm:$0xff]
    %v94 = vld [vmem:[%s2] sm:$0x3]
    %v96 = vlaneseq
    %v97 = vshrl.u32 %v96, 7
    %v98 = vsub.s32 0, %v97
    %v99 = vrot.slane %v94, %v98
    %v100 = vlaneseq
    %v101 = vshrl.u32 %v100, 7
    %v102 = vsub.s32 1, %v101
    %v103 = vrot.slane %v94, %v102
    %v135 = vunpack.c.l.b16 %v65
    %v136 = vunpack.c.h.b16 %v65
    %v137 = vunpack.c.l.b16 %v66
    %v138 = vunpack.c.h.b16 %v66
    %v139 = vunpack.c.l.b16 %v67
    %v140 = vunpack.c.h.b16 %v67
    %v141 = vunpack.c.l.b16 %v68
    %v142 = vunpack.c.h.b16 %v68
    %v143 = vunpack.c.l.b16 %v69
    %v144 = vunpack.c.h.b16 %v69
    %v145 = vunpack.c.l.b16 %v70
    %v146 = vunpack.c.h.b16 %v70
    %v147 = vunpack.c.l.b16 %v71
    %v148 = vunpack.c.h.b16 %v71
    %v149 = vunpack.c.l.b16 %v72
    %v150 = vunpack.c.h.b16 %v72
    %v151 = vunpack.c.l.b16 %v73
    %v152 = vunpack.c.h.b16 %v73
    %v153 = vunpack.c.l.b16 %v74
    %v154 = vunpack.c.h.b16 %v74
    %v155 = vunpack.c.l.b16 %v75
    %v156 = vunpack.c.h.b16 %v75
    %v157 = vunpack.c.l.b16 %v76
    %v158 = vunpack.c.h.b16 %v76
    %v159 = vunpack.c.l.b16 %v77
    %v160 = vunpack.c.h.b16 %v77
    %v161 = vunpack.c.l.b16 %v78
    %v162 = vunpack.c.h.b16 %v78
    %v163 = vunpack.c.l.b16 %v79
    %v164 = vunpack.c.h.b16 %v79
    %v165 = vunpack.c.l.b16 %v80
    %v166 = vunpack.c.h.b16 %v80
    %v167 = vunpack.c.l.b16 %v81
    %v168 = vunpack.c.h.b16 %v81
    %v169 = vunpack.c.l.b16 %v82
    %v170 = vunpack.c.h.b16 %v82
    %v171 = vunpack.c.l.b16 %v83
    %v172 = vunpack.c.h.b16 %v83
    %v173 = vunpack.c.l.b16 %v84
    %v174 = vunpack.c.h.b16 %v84
    %v175 = vunpack.c.l.b16 %v85
    %v176 = vunpack.c.h.b16 %v85
    %v177 = vunpack.c.l.b16 %v86
    %v178 = vunpack.c.h.b16 %v86
    %v179 = vunpack.c.l.b16 %v87
    %v180 = vunpack.c.h.b16 %v87
    %v181 = vunpack.c.l.b16 %v88
    %v182 = vunpack.c.h.b16 %v88
    %v183 = vunpack.c.l.b16 %v89
    %v184 = vunpack.c.h.b16 %v89
    %v185 = vunpack.c.l.b16 %v90
    %v186 = vunpack.c.h.b16 %v90
    %v187 = vunpack.c.l.b16 %v91
    %v188 = vunpack.c.h.b16 %v91
    %v189 = vunpack.c.l.b16 %v92
    %v190 = vunpack.c.h.b16 %v92
    %v191 = vunpack.c.l.b16 %v93
    %v192 = vunpack.c.h.b16 %v93
    %v193 = vpack.c.b16 %v137, %v135
    %v194 = vpack.c.b16 %v138, %v136
    %v195 = vpack.c.b16 %v141, %v139
    %v196 = vpack.c.b16 %v142, %v140
    %v197 = vpack.c.b16 %v145, %v143
    %v198 = vpack.c.b16 %v146, %v144
    %v199 = vpack.c.b16 %v149, %v147
    %v200 = vpack.c.b16 %v150, %v148
    %v201 = vpack.c.b16 %v153, %v151
    %v202 = vpack.c.b16 %v154, %v152
    %v203 = vpack.c.b16 %v157, %v155
    %v204 = vpack.c.b16 %v158, %v156
    %v205 = vpack.c.b16 %v161, %v159
    %v206 = vpack.c.b16 %v162, %v160
    %v207 = vpack.c.b16 %v165, %v163
    %v208 = vpack.c.b16 %v166, %v164
    %v209 = vpack.c.b16 %v169, %v167
    %v210 = vpack.c.b16 %v170, %v168
    %v211 = vpack.c.b16 %v173, %v171
    %v212 = vpack.c.b16 %v174, %v172
    %v213 = vpack.c.b16 %v177, %v175
    %v214 = vpack.c.b16 %v178, %v176
    %v215 = vpack.c.b16 %v181, %v179
    %v216 = vpack.c.b16 %v182, %v180
    %v217 = vpack.c.b16 %v185, %v183
    %v218 = vpack.c.b16 %v186, %v184
    %v219 = vpack.c.b16 %v189, %v187
    %v220 = vpack.c.b16 %v190, %v188
    %v221 = vpack.c.b16 %v191, %v191
    %v222 = vpack.c.b16 %v192, %v192
    %vm251 = vcmask 850944
    %v253 = vsel %vm251, %v64, 0
    %vm255 = vcmask 1043456
    %v257 = vsel %vm255, %v221, 0
    %v260 = vsel %vm255, %v222, 0
    %262 = vmatprep.subr.bf16.mxu0 %v194
    %263 = vmatpush1.bf16.msra.mxu0 %v193
    %264 = vmatprep.subr.bf16.mxu0 %v196
    %265 = vmatpush1.bf16.msra.mxu0 %v195
    %266 = vmatprep.subr.bf16.mxu0 %v198
    %267 = vmatpush1.bf16.msra.mxu0 %v197
    %268 = vmatprep.subr.bf16.mxu0 %v200
    %269 = vmatpush1.bf16.msra.mxu0 %v199
    %270 = vmatprep.subr.bf16.mxu0 %v202
    %271 = vmatpush1.bf16.msra.mxu0 %v201
    %272 = vmatprep.subr.bf16.mxu0 %v204
    %273 = vmatpush1.bf16.msra.mxu0 %v203
    %274 = vmatprep.subr.bf16.mxu0 %v206
    %275 = vmatpush1.bf16.msra.mxu0 %v205
    %276 = vmatprep.subr.bf16.mxu0 %v208
    %277 = vmatpush1.bf16.msra.mxu0 %v207
    %278 = vmatprep.subr.bf16.mxu0 %v210
    %279 = vmatpush1.bf16.msra.mxu0 %v209
    %280 = vmatprep.subr.bf16.mxu0 %v212
    %281 = vmatpush1.bf16.msra.mxu0 %v211
    %282 = vmatprep.subr.bf16.mxu0 %v214
    %283 = vmatpush1.bf16.msra.mxu0 %v213
    %284 = vmatprep.subr.bf16.mxu0 %v216
    %285 = vmatpush1.bf16.msra.mxu0 %v215
    %286 = vmatprep.subr.bf16.mxu0 %v218
    %287 = vmatpush1.bf16.msra.mxu0 %v217
    %288 = vmatprep.subr.bf16.mxu0 %v220
    %289 = vmatpush1.bf16.msra.mxu0 %v219
    %290 = vmatprep.subr.bf16.mxu0 %v260
    %291 = vmatpush1.bf16.msra.mxu0 %v257
    %292 = vmatprep.subr.bf16.mxu0 0
    %293 = vmatpush1.bf16.msra.mxu0 0
    %294 = vmatprep.mubr.bf16.mxu0 %v253
    %295 = vmatmul.mubr.bf16.gmra.mrb[0].mxu0 %v63
    %v296 = vpop.f32.mrb[0].mxu0
    %v297 = vadd.f32 %v99, %v296
    %v298 = vpop.f32.mrb[0].mxu0
    %v299 = vadd.f32 %v103, %v298
    %v300 = vpop.f32.mrb[0].mxu0
    %v301 = vpop.f32.mrb[0].mxu0
    %302 = vdwg.mxu0
    %v303 = vmax.f32 %v297, 0.0
    %v304 = vmax.f32 %v299, 0.0
    %v305 = vpack.c.bf16 %v303, %v303
    %v306 = vpack.c.bf16 %v304, %v304
    %v307 = vld [vmem:[%s3] sm:$0xff]
    %v308 = vld [vmem:[%s3 + $0x8] sm:$0xff]
    %v309 = vld [vmem:[%s3 + $0x10] sm:$0xff]
    %v310 = vld [vmem:[%s3 + $0x18] sm:$0xff]
    %v311 = vld [vmem:[%s3 + $0x20] sm:$0xff]
    %v312 = vld [vmem:[%s3 + $0x28] sm:$0xff]
    %v313 = vld [vmem:[%s3 + $0x30] sm:$0xff]
    %v314 = vld [vmem:[%s3 + $0x38] sm:$0xff]
    %v315 = vld [vmem:[%s3 + $0x40] sm:$0xff]
    %v316 = vld [vmem:[%s3 + $0x48] sm:$0xff]
    %v317 = vld [vmem:[%s3 + $0x50] sm:$0xff]
    %v318 = vld [vmem:[%s3 + $0x58] sm:$0xff]
    %v319 = vld [vmem:[%s3 + $0x60] sm:$0xff]
    %v320 = vld [vmem:[%s3 + $0x68] sm:$0xff]
    %v321 = vld [vmem:[%s3 + $0x70] sm:$0xff]
    %v322 = vld [vmem:[%s3 + $0x78] sm:$0xff]
    %v323 = vld [vmem:[%s3 + $0x80] sm:$0xff]
    %v324 = vld [vmem:[%s3 + $0x88] sm:$0xff]
    %v325 = vld [vmem:[%s3 + $0x90] sm:$0xff]
    %v326 = vld [vmem:[%s3 + $0x98] sm:$0xff]
    %v327 = vld [vmem:[%s3 + $0xa0] sm:$0xff]
    %v328 = vld [vmem:[%s3 + $0xa8] sm:$0xff]
    %v329 = vld [vmem:[%s3 + $0xb0] sm:$0xff]
    %v330 = vld [vmem:[%s3 + $0xb8] sm:$0xff]
    %v331 = vld [vmem:[%s3 + $0xc0] sm:$0xff]
    %v332 = vld [vmem:[%s3 + $0xc8] sm:$0xff]
    %v333 = vld [vmem:[%s3 + $0xd0] sm:$0xff]
    %v334 = vld [vmem:[%s3 + $0xd8] sm:$0xff]
    %v335 = vld [vmem:[%s3 + $0xe0] sm:$0xff]
    %v336 = vld [vmem:[%s3 + $0xe8] sm:$0xff]
    %v337 = vld [vmem:[%s3 + $0xf0] sm:$0xff]
    %v338 = vld [vmem:[%s3 + $0xf8] sm:$0xff]
    %v339 = vld [vmem:[%s4] sm:$0x3]
    %v341 = vlaneseq
    %v342 = vshrl.u32 %v341, 7
    %v343 = vsub.s32 0, %v342
    %v344 = vrot.slane %v339, %v343
    %v345 = vlaneseq
    %v346 = vshrl.u32 %v345, 7
    %v347 = vsub.s32 1, %v346
    %v348 = vrot.slane %v339, %v347
    %v383 = vunpack.c.l.b16 %v307
    %v384 = vunpack.c.h.b16 %v307
    %v385 = vunpack.c.l.b16 %v308
    %v386 = vunpack.c.h.b16 %v308
    %v387 = vunpack.c.l.b16 %v309
    %v388 = vunpack.c.h.b16 %v309
    %v389 = vunpack.c.l.b16 %v310
    %v390 = vunpack.c.h.b16 %v310
    %v391 = vunpack.c.l.b16 %v311
    %v392 = vunpack.c.h.b16 %v311
    %v393 = vunpack.c.l.b16 %v312
    %v394 = vunpack.c.h.b16 %v312
    %v395 = vunpack.c.l.b16 %v313
    %v396 = vunpack.c.h.b16 %v313
    %v397 = vunpack.c.l.b16 %v314
    %v398 = vunpack.c.h.b16 %v314
    %v399 = vunpack.c.l.b16 %v315
    %v400 = vunpack.c.h.b16 %v315
    %v401 = vunpack.c.l.b16 %v316
    %v402 = vunpack.c.h.b16 %v316
    %v403 = vunpack.c.l.b16 %v317
    %v404 = vunpack.c.h.b16 %v317
    %v405 = vunpack.c.l.b16 %v318
    %v406 = vunpack.c.h.b16 %v318
    %v407 = vunpack.c.l.b16 %v319
    %v408 = vunpack.c.h.b16 %v319
    %v409 = vunpack.c.l.b16 %v320
    %v410 = vunpack.c.h.b16 %v320
    %v411 = vunpack.c.l.b16 %v321
    %v412 = vunpack.c.h.b16 %v321
    %v413 = vunpack.c.l.b16 %v322
    %v414 = vunpack.c.h.b16 %v322
    %v415 = vunpack.c.l.b16 %v323
    %v416 = vunpack.c.h.b16 %v323
    %v417 = vunpack.c.l.b16 %v324
    %v418 = vunpack.c.h.b16 %v324
    %v419 = vunpack.c.l.b16 %v325
    %v420 = vunpack.c.h.b16 %v325
    %v421 = vunpack.c.l.b16 %v326
    %v422 = vunpack.c.h.b16 %v326
    %v423 = vunpack.c.l.b16 %v327
    %v424 = vunpack.c.h.b16 %v327
    %v425 = vunpack.c.l.b16 %v328
    %v426 = vunpack.c.h.b16 %v328
    %v427 = vunpack.c.l.b16 %v329
    %v428 = vunpack.c.h.b16 %v329
    %v429 = vunpack.c.l.b16 %v330
    %v430 = vunpack.c.h.b16 %v330
    %v431 = vunpack.c.l.b16 %v331
    %v432 = vunpack.c.h.b16 %v331
    %v433 = vunpack.c.l.b16 %v332
    %v434 = vunpack.c.h.b16 %v332
    %v435 = vunpack.c.l.b16 %v333
    %v436 = vunpack.c.h.b16 %v333
    %v437 = vunpack.c.l.b16 %v334
    %v438 = vunpack.c.h.b16 %v334
    %v439 = vunpack.c.l.b16 %v335
    %v440 = vunpack.c.h.b16 %v335
    %v441 = vunpack.c.l.b16 %v336
    %v442 = vunpack.c.h.b16 %v336
    %v443 = vunpack.c.l.b16 %v337
    %v444 = vunpack.c.h.b16 %v337
    %v445 = vunpack.c.l.b16 %v338
    %v446 = vunpack.c.h.b16 %v338
    %v447 = vpack.c.b16 %v385, %v383
    %v448 = vpack.c.b16 %v386, %v384
    %v449 = vpack.c.b16 %v389, %v387
    %v450 = vpack.c.b16 %v390, %v388
    %v451 = vpack.c.b16 %v393, %v391
    %v452 = vpack.c.b16 %v394, %v392
    %v453 = vpack.c.b16 %v397, %v395
    %v454 = vpack.c.b16 %v398, %v396
    %v455 = vpack.c.b16 %v401, %v399
    %v456 = vpack.c.b16 %v402, %v400
    %v457 = vpack.c.b16 %v405, %v403
    %v458 = vpack.c.b16 %v406, %v404
    %v459 = vpack.c.b16 %v409, %v407
    %v460 = vpack.c.b16 %v410, %v408
    %v461 = vpack.c.b16 %v413, %v411
    %v462 = vpack.c.b16 %v414, %v412
    %v463 = vpack.c.b16 %v417, %v415
    %v464 = vpack.c.b16 %v418, %v416
    %v465 = vpack.c.b16 %v421, %v419
    %v466 = vpack.c.b16 %v422, %v420
    %v467 = vpack.c.b16 %v425, %v423
    %v468 = vpack.c.b16 %v426, %v424
    %v469 = vpack.c.b16 %v429, %v427
    %v470 = vpack.c.b16 %v430, %v428
    %v471 = vpack.c.b16 %v433, %v431
    %v472 = vpack.c.b16 %v434, %v432
    %v473 = vpack.c.b16 %v437, %v435
    %v474 = vpack.c.b16 %v438, %v436
    %v475 = vpack.c.b16 %v441, %v439
    %v476 = vpack.c.b16 %v442, %v440
    %v477 = vpack.c.b16 %v445, %v443
    %v478 = vpack.c.b16 %v446, %v444
    %511 = vmatprep.subr.bf16.mxu0 %v448
    %512 = vmatpush1.bf16.msra.mxu0 %v447
    %513 = vmatprep.subr.bf16.mxu0 %v450
    %514 = vmatpush1.bf16.msra.mxu0 %v449
    %515 = vmatprep.subr.bf16.mxu0 %v452
    %516 = vmatpush1.bf16.msra.mxu0 %v451
    %517 = vmatprep.subr.bf16.mxu0 %v454
    %518 = vmatpush1.bf16.msra.mxu0 %v453
    %519 = vmatprep.subr.bf16.mxu0 %v456
    %520 = vmatpush1.bf16.msra.mxu0 %v455
    %521 = vmatprep.subr.bf16.mxu0 %v458
    %522 = vmatpush1.bf16.msra.mxu0 %v457
    %523 = vmatprep.subr.bf16.mxu0 %v460
    %524 = vmatpush1.bf16.msra.mxu0 %v459
    %525 = vmatprep.subr.bf16.mxu0 %v462
    %526 = vmatpush1.bf16.msra.mxu0 %v461
    %527 = vmatprep.subr.bf16.mxu0 %v464
    %528 = vmatpush1.bf16.msra.mxu0 %v463
    %529 = vmatprep.subr.bf16.mxu0 %v466
    %530 = vmatpush1.bf16.msra.mxu0 %v465
    %531 = vmatprep.subr.bf16.mxu0 %v468
    %532 = vmatpush1.bf16.msra.mxu0 %v467
    %533 = vmatprep.subr.bf16.mxu0 %v470
    %534 = vmatpush1.bf16.msra.mxu0 %v469
    %535 = vmatprep.subr.bf16.mxu0 %v472
    %536 = vmatpush1.bf16.msra.mxu0 %v471
    %537 = vmatprep.subr.bf16.mxu0 %v474
    %538 = vmatpush1.bf16.msra.mxu0 %v473
    %539 = vmatprep.subr.bf16.mxu0 %v476
    %540 = vmatpush1.bf16.msra.mxu0 %v475
    %541 = vmatprep.subr.bf16.mxu0 %v478
    %542 = vmatpush1.bf16.msra.mxu0 %v477
    %543 = vmatprep.mubr.bf16.mxu0 %v306
    %544 = vmatmul.mubr.bf16.gmra.mrb[0].mxu0 %v305
    %v545 = vpop.f32.mrb[0].mxu0
    %v546 = vadd.f32 %v344, %v545
    %v547 = vpop.f32.mrb[0].mxu0
    %v548 = vadd.f32 %v348, %v547
    %v549 = vpop.f32.mrb[0].mxu0
    %v550 = vpop.f32.mrb[0].mxu0
    %551 = vdwg.mxu0
    %v552 = vmax.f32 %v546, 0.0
    %v553 = vmax.f32 %v548, 0.0
    %v554 = vpack.c.bf16 %v552, %v552
    %v555 = vpack.c.bf16 %v553, %v553
    %v556 = vld [vmem:[#allocation4] sm:$0xff]
    %v557 = vld [vmem:[#allocation4 + $0x8] sm:$0xff]
    %v558 = vld [vmem:[#allocation4 + $0x10] sm:$0xff]
    %v559 = vld [vmem:[#allocation4 + $0x18] sm:$0xff]
    %v560 = vld [vmem:[#allocation4 + $0x20] sm:$0xff]
    %v561 = vld [vmem:[#allocation4 + $0x28] sm:$0xff]
    %v562 = vld [vmem:[#allocation4 + $0x30] sm:$0xff]
    %v563 = vld [vmem:[#allocation4 + $0x38] sm:$0xff]
    %v564 = vld [vmem:[#allocation4 + $0x40] sm:$0xff]
    %v565 = vld [vmem:[#allocation4 + $0x48] sm:$0xff]
    %v566 = vld [vmem:[#allocation4 + $0x50] sm:$0xff]
    %v567 = vld [vmem:[#allocation4 + $0x58] sm:$0xff]
    %v568 = vld [vmem:[#allocation4 + $0x60] sm:$0xff]
    %v569 = vld [vmem:[#allocation4 + $0x68] sm:$0xff]
    %v570 = vld [vmem:[#allocation4 + $0x70] sm:$0xff]
    %v571 = vld [vmem:[#allocation4 + $0x78] sm:$0xff]
    %v572 = vld [vmem:[#allocation4 + $0x80] sm:$0xff]
    %v573 = vld [vmem:[#allocation4 + $0x88] sm:$0xff]
    %v574 = vld [vmem:[#allocation4 + $0x90] sm:$0xff]
    %v575 = vld [vmem:[#allocation4 + $0x98] sm:$0xff]
    %v576 = vld [vmem:[#allocation4 + $0xa0] sm:$0xff]
    %v577 = vld [vmem:[#allocation4 + $0xa8] sm:$0xff]
    %v578 = vld [vmem:[#allocation4 + $0xb0] sm:$0xff]
    %v579 = vld [vmem:[#allocation4 + $0xb8] sm:$0xff]
    %v580 = vld [vmem:[#allocation4 + $0xc0] sm:$0xff]
    %v581 = vld [vmem:[#allocation4 + $0xc8] sm:$0xff]
    %v582 = vld [vmem:[#allocation4 + $0xd0] sm:$0xff]
    %v583 = vld [vmem:[#allocation4 + $0xd8] sm:$0xff]
    %v584 = vld [vmem:[#allocation4 + $0xe0] sm:$0xff]
    %v585 = vld [vmem:[#allocation4 + $0xe8] sm:$0xff]
    %v586 = vld [vmem:[#allocation4 + $0xf0] sm:$0xff]
    %v587 = vld [vmem:[#allocation4 + $0xf8] sm:$0xff]
    %v588 = vld [vmem:[%s6] sm:$0x3]
    %v590 = vlaneseq
    %v591 = vshrl.u32 %v590, 7
    %v592 = vsub.s32 0, %v591
    %v593 = vrot.slane %v588, %v592
    %v594 = vlaneseq
    %v595 = vshrl.u32 %v594, 7
    %v596 = vsub.s32 1, %v595
    %v597 = vrot.slane %v588, %v596
    %v632 = vunpack.c.l.b16 %v556
    %v633 = vunpack.c.h.b16 %v556
    %v634 = vunpack.c.l.b16 %v557
    %v635 = vunpack.c.h.b16 %v557
    %v636 = vunpack.c.l.b16 %v558
    %v637 = vunpack.c.h.b16 %v558
    %v638 = vunpack.c.l.b16 %v559
    %v639 = vunpack.c.h.b16 %v559
    %v640 = vunpack.c.l.b16 %v560
    %v641 = vunpack.c.h.b16 %v560
    %v642 = vunpack.c.l.b16 %v561
    %v643 = vunpack.c.h.b16 %v561
    %v644 = vunpack.c.l.b16 %v562
    %v645 = vunpack.c.h.b16 %v562
    %v646 = vunpack.c.l.b16 %v563
    %v647 = vunpack.c.h.b16 %v563
    %v648 = vunpack.c.l.b16 %v564
    %v649 = vunpack.c.h.b16 %v564
    %v650 = vunpack.c.l.b16 %v565
    %v651 = vunpack.c.h.b16 %v565
    %v652 = vunpack.c.l.b16 %v566
    %v653 = vunpack.c.h.b16 %v566
    %v654 = vunpack.c.l.b16 %v567
    %v655 = vunpack.c.h.b16 %v567
    %v656 = vunpack.c.l.b16 %v568
    %v657 = vunpack.c.h.b16 %v568
    %v658 = vunpack.c.l.b16 %v569
    %v659 = vunpack.c.h.b16 %v569
    %v660 = vunpack.c.l.b16 %v570
    %v661 = vunpack.c.h.b16 %v570
    %v662 = vunpack.c.l.b16 %v571
    %v663 = vunpack.c.h.b16 %v571
    %v664 = vunpack.c.l.b16 %v572
    %v665 = vunpack.c.h.b16 %v572
    %v666 = vunpack.c.l.b16 %v573
    %v667 = vunpack.c.h.b16 %v573
    %v668 = vunpack.c.l.b16 %v574
    %v669 = vunpack.c.h.b16 %v574
    %v670 = vunpack.c.l.b16 %v575
    %v671 = vunpack.c.h.b16 %v575
    %v672 = vunpack.c.l.b16 %v576
    %v673 = vunpack.c.h.b16 %v576
    %v674 = vunpack.c.l.b16 %v577
    %v675 = vunpack.c.h.b16 %v577
    %v676 = vunpack.c.l.b16 %v578
    %v677 = vunpack.c.h.b16 %v578
    %v678 = vunpack.c.l.b16 %v579
    %v679 = vunpack.c.h.b16 %v579
    %v680 = vunpack.c.l.b16 %v580
    %v681 = vunpack.c.h.b16 %v580
    %v682 = vunpack.c.l.b16 %v581
    %v683 = vunpack.c.h.b16 %v581
    %v684 = vunpack.c.l.b16 %v582
    %v685 = vunpack.c.h.b16 %v582
    %v686 = vunpack.c.l.b16 %v583
    %v687 = vunpack.c.h.b16 %v583
    %v688 = vunpack.c.l.b16 %v584
    %v689 = vunpack.c.h.b16 %v584
    %v690 = vunpack.c.l.b16 %v585
    %v691 = vunpack.c.h.b16 %v585
    %v692 = vunpack.c.l.b16 %v586
    %v693 = vunpack.c.h.b16 %v586
    %v694 = vunpack.c.l.b16 %v587
    %v695 = vunpack.c.h.b16 %v587
    %v696 = vpack.c.b16 %v634, %v632
    %v697 = vpack.c.b16 %v635, %v633
    %v698 = vpack.c.b16 %v638, %v636
    %v699 = vpack.c.b16 %v639, %v637
    %v700 = vpack.c.b16 %v642, %v640
    %v701 = vpack.c.b16 %v643, %v641
    %v702 = vpack.c.b16 %v646, %v644
    %v703 = vpack.c.b16 %v647, %v645
    %v704 = vpack.c.b16 %v650, %v648
    %v705 = vpack.c.b16 %v651, %v649
    %v706 = vpack.c.b16 %v654, %v652
    %v707 = vpack.c.b16 %v655, %v653
    %v708 = vpack.c.b16 %v658, %v656
    %v709 = vpack.c.b16 %v659, %v657
    %v710 = vpack.c.b16 %v662, %v660
    %v711 = vpack.c.b16 %v663, %v661
    %v712 = vpack.c.b16 %v666, %v664
    %v713 = vpack.c.b16 %v667, %v665
    %v714 = vpack.c.b16 %v670, %v668
    %v715 = vpack.c.b16 %v671, %v669
    %v716 = vpack.c.b16 %v674, %v672
    %v717 = vpack.c.b16 %v675, %v673
    %v718 = vpack.c.b16 %v678, %v676
    %v719 = vpack.c.b16 %v679, %v677
    %v720 = vpack.c.b16 %v682, %v680
    %v721 = vpack.c.b16 %v683, %v681
    %v722 = vpack.c.b16 %v686, %v684
    %v723 = vpack.c.b16 %v687, %v685
    %v724 = vpack.c.b16 %v690, %v688
    %v725 = vpack.c.b16 %v691, %v689
    %v726 = vpack.c.b16 %v694, %v692
    %v727 = vpack.c.b16 %v695, %v693
    %760 = vmatprep.subr.bf16.mxu0 %v697
    %761 = vmatpush1.bf16.msra.mxu0 %v696
    %762 = vmatprep.subr.bf16.mxu0 %v699
    %763 = vmatpush1.bf16.msra.mxu0 %v698
    %764 = vmatprep.subr.bf16.mxu0 %v701
    %765 = vmatpush1.bf16.msra.mxu0 %v700
    %766 = vmatprep.subr.bf16.mxu0 %v703
    %767 = vmatpush1.bf16.msra.mxu0 %v702
    %768 = vmatprep.subr.bf16.mxu0 %v705
    %769 = vmatpush1.bf16.msra.mxu0 %v704
    %770 = vmatprep.subr.bf16.mxu0 %v707
    %771 = vmatpush1.bf16.msra.mxu0 %v706
    %772 = vmatprep.subr.bf16.mxu0 %v709
    %773 = vmatpush1.bf16.msra.mxu0 %v708
    %774 = vmatprep.subr.bf16.mxu0 %v711
    %775 = vmatpush1.bf16.msra.mxu0 %v710
    %776 = vmatprep.subr.bf16.mxu0 %v713
    %777 = vmatpush1.bf16.msra.mxu0 %v712
    %778 = vmatprep.subr.bf16.mxu0 %v715
    %779 = vmatpush1.bf16.msra.mxu0 %v714
    %780 = vmatprep.subr.bf16.mxu0 %v717
    %781 = vmatpush1.bf16.msra.mxu0 %v716
    %782 = vmatprep.subr.bf16.mxu0 %v719
    %783 = vmatpush1.bf16.msra.mxu0 %v718
    %784 = vmatprep.subr.bf16.mxu0 %v721
    %785 = vmatpush1.bf16.msra.mxu0 %v720
    %786 = vmatprep.subr.bf16.mxu0 %v723
    %787 = vmatpush1.bf16.msra.mxu0 %v722
    %788 = vmatprep.subr.bf16.mxu0 %v725
    %789 = vmatpush1.bf16.msra.mxu0 %v724
    %790 = vmatprep.subr.bf16.mxu0 %v727
    %791 = vmatpush1.bf16.msra.mxu0 %v726
    %792 = vmatprep.mubr.bf16.mxu0 %v555
    %793 = vmatmul.mubr.bf16.gmra.mrb[0].mxu0 %v554
    %v794 = vpop.f32.mrb[0].mxu0
    %v795 = vadd.f32 %v593, %v794
    %v796 = vpop.f32.mrb[0].mxu0
    %v797 = vadd.f32 %v597, %v796
    %v798 = vpop.f32.mrb[0].mxu0
    %v799 = vpop.f32.mrb[0].mxu0
    %800 = vdwg.mxu0
    %v801 = vmax.f32 %v795, 0.0
    %v802 = vmax.f32 %v797, 0.0
    %v803 = vpack.c.bf16 %v801, %v801
    %v804 = vpack.c.bf16 %v802, %v802
    %v805 = vld [vmem:[%s7] sm:$0xf]
    %v806 = vld [vmem:[%s7 + $0x4] sm:$0xf]
    %v807 = vld [vmem:[%s7 + $0x8] sm:$0xf]
    %v808 = vld [vmem:[%s7 + $0xc] sm:$0xf]
    %v809 = vld [vmem:[%s7 + $0x10] sm:$0xf]
    %v810 = vld [vmem:[%s7 + $0x14] sm:$0xf]
    %v811 = vld [vmem:[%s7 + $0x18] sm:$0xf]
    %v812 = vld [vmem:[%s7 + $0x1c] sm:$0xf]
    %v813 = vld [vmem:[%s7 + $0x20] sm:$0xf]
    %v814 = vld [vmem:[%s7 + $0x24] sm:$0xf]
    %v815 = vld [vmem:[%s7 + $0x28] sm:$0xf]
    %v816 = vld [vmem:[%s7 + $0x2c] sm:$0xf]
    %v817 = vld [vmem:[%s7 + $0x30] sm:$0xf]
    %v818 = vld [vmem:[%s7 + $0x34] sm:$0xf]
    %v819 = vld [vmem:[%s7 + $0x38] sm:$0xf]
    %v820 = vld [vmem:[%s7 + $0x3c] sm:$0xf]
    %v821 = vld [vmem:[%s7 + $0x40] sm:$0xf]
    %v822 = vld [vmem:[%s7 + $0x44] sm:$0xf]
    %v823 = vld [vmem:[%s7 + $0x48] sm:$0xf]
    %v824 = vld [vmem:[%s7 + $0x4c] sm:$0xf]
    %v825 = vld [vmem:[%s7 + $0x50] sm:$0xf]
    %v826 = vld [vmem:[%s7 + $0x54] sm:$0xf]
    %v827 = vld [vmem:[%s7 + $0x58] sm:$0xf]
    %v828 = vld [vmem:[%s7 + $0x5c] sm:$0xf]
    %v829 = vld [vmem:[%s7 + $0x60] sm:$0xf]
    %v830 = vld [vmem:[%s7 + $0x64] sm:$0xf]
    %v831 = vld [vmem:[%s7 + $0x68] sm:$0xf]
    %v832 = vld [vmem:[%s7 + $0x6c] sm:$0xf]
    %v833 = vld [vmem:[%s7 + $0x70] sm:$0xf]
    %v834 = vld [vmem:[%s7 + $0x74] sm:$0xf]
    %v835 = vld [vmem:[%s7 + $0x78] sm:$0xf]
    %v836 = vld [vmem:[%s7 + $0x7c] sm:$0xf]
    %v837 = vld [vmem:[%s8] sm:$0x1]
    %v839 = vlaneseq
    %v840 = vshrl.u32 %v839, 7
    %v841 = vsub.s32 0, %v840
    %v842 = vrot.slane %v837, %v841
    %v876 = vunpack.c.l.b16 %v805
    %v877 = vunpack.c.l.b16 %v806
    %v878 = vunpack.c.l.b16 %v807
    %v879 = vunpack.c.l.b16 %v808
    %v880 = vunpack.c.l.b16 %v809
    %v881 = vunpack.c.l.b16 %v810
    %v882 = vunpack.c.l.b16 %v811
    %v883 = vunpack.c.l.b16 %v812
    %v884 = vunpack.c.l.b16 %v813
    %v885 = vunpack.c.l.b16 %v814
    %v886 = vunpack.c.l.b16 %v815
    %v887 = vunpack.c.l.b16 %v816
    %v888 = vunpack.c.l.b16 %v817
    %v889 = vunpack.c.l.b16 %v818
    %v890 = vunpack.c.l.b16 %v819
    %v891 = vunpack.c.l.b16 %v820
    %v892 = vunpack.c.l.b16 %v821
    %v893 = vunpack.c.l.b16 %v822
    %v894 = vunpack.c.l.b16 %v823
    %v895 = vunpack.c.l.b16 %v824
    %v896 = vunpack.c.l.b16 %v825
    %v897 = vunpack.c.l.b16 %v826
    %v898 = vunpack.c.l.b16 %v827
    %v899 = vunpack.c.l.b16 %v828
    %v900 = vunpack.c.l.b16 %v829
    %v901 = vunpack.c.l.b16 %v830
    %v902 = vunpack.c.l.b16 %v831
    %v903 = vunpack.c.l.b16 %v832
    %v904 = vunpack.c.l.b16 %v833
    %v905 = vunpack.c.l.b16 %v834
    %v906 = vunpack.c.l.b16 %v835
    %v907 = vunpack.c.l.b16 %v836
    %v908 = vpack.c.b16 %v877, %v876
    %v909 = vpack.c.b16 %v879, %v878
    %v910 = vpack.c.b16 %v881, %v880
    %v911 = vpack.c.b16 %v883, %v882
    %v912 = vpack.c.b16 %v885, %v884
    %v913 = vpack.c.b16 %v887, %v886
    %v914 = vpack.c.b16 %v889, %v888
    %v915 = vpack.c.b16 %v891, %v890
    %v916 = vpack.c.b16 %v893, %v892
    %v917 = vpack.c.b16 %v895, %v894
    %v918 = vpack.c.b16 %v897, %v896
    %v919 = vpack.c.b16 %v899, %v898
    %v920 = vpack.c.b16 %v901, %v900
    %v921 = vpack.c.b16 %v903, %v902
    %v922 = vpack.c.b16 %v905, %v904
    %v923 = vpack.c.b16 %v907, %v906
    %940 = vmatprep.subr.bf16.mxu0 0
    %941 = vmatpush1.bf16.msra.mxu0 %v908
    %942 = vmatprep.subr.bf16.mxu0 0
    %943 = vmatpush1.bf16.msra.mxu0 %v909
    %944 = vmatprep.subr.bf16.mxu0 0
    %945 = vmatpush1.bf16.msra.mxu0 %v910
    %946 = vmatprep.subr.bf16.mxu0 0
    %947 = vmatpush1.bf16.msra.mxu0 %v911
    %948 = vmatprep.subr.bf16.mxu0 0
    %949 = vmatpush1.bf16.msra.mxu0 %v912
    %950 = vmatprep.subr.bf16.mxu0 0
    %951 = vmatpush1.bf16.msra.mxu0 %v913
    %952 = vmatprep.subr.bf16.mxu0 0
    %953 = vmatpush1.bf16.msra.mxu0 %v914
    %954 = vmatprep.subr.bf16.mxu0 0
    %955 = vmatpush1.bf16.msra.mxu0 %v915
    %956 = vmatprep.subr.bf16.mxu0 0
    %957 = vmatpush1.bf16.msra.mxu0 %v916
    %958 = vmatprep.subr.bf16.mxu0 0
    %959 = vmatpush1.bf16.msra.mxu0 %v917
    %960 = vmatprep.subr.bf16.mxu0 0
    %961 = vmatpush1.bf16.msra.mxu0 %v918
    %962 = vmatprep.subr.bf16.mxu0 0
    %963 = vmatpush1.bf16.msra.mxu0 %v919
    %964 = vmatprep.subr.bf16.mxu0 0
    %965 = vmatpush1.bf16.msra.mxu0 %v920
    %966 = vmatprep.subr.bf16.mxu0 0
    %967 = vmatpush1.bf16.msra.mxu0 %v921
    %968 = vmatprep.subr.bf16.mxu0 0
    %969 = vmatpush1.bf16.msra.mxu0 %v922
    %970 = vmatprep.subr.bf16.mxu0 0
    %971 = vmatpush1.bf16.msra.mxu0 %v923
    %972 = vmatprep.mubr.bf16.mxu0 %v804
    %973 = vmatmul.mubr.bf16.gmra.mrb[0].mxu0 %v803
    %v974 = vpop.f32.mrb[0].mxu0
    %v975 = vadd.f32 %v842, %v974
    %v976 = vpop.f32.mrb[0].mxu0
    %v977 = vpop.f32.mrb[0].mxu0
    %v978 = vpop.f32.mrb[0].mxu0
    %979 = vdwg.mxu0
    %v980 = vand.u32 2147483647, %v975
    %v981 = vsub.f32 0.0, %v980
    %v982 = vmul.f32 %v981, 1.442695
    %v983 = vpow.pop %v982
    %v984 = vadd.f32 %v983, 1.0
    %v985 = vrcp.pop %v984
    %v986 = vmul.f32 %v983, %v985
    %vm987 = vcmp.ge.f32.partialorder %v975, 0.0
    %v988 = vsub.f32 1.0, %v986
    %v989 = vsel %vm987, %v988, %v986
    %v990 = vlaneseq
    %v991 = vand.u32 %v990, 127
    %v992 = vand.u32 %v991, 3
    %vm993 = vcmp.eq.s32.totalorder %v992, 0
    %v994 = vsub.f32 1.0, %v989
    %vm995 = vcmp.eq.s32.totalorder %v992, 1
    %vm996 = vcmp.eq.s32.totalorder %v992, 2
    %v997 = vsel %vm996, %v975, 0.0
    %v998 = vsel %vm995, %v989, %v997
    %v999 = vsel %vm993, %v994, %v998
    %vm1000 = vcmask 261120
    %1001 = vst.msk [vmem:[%s9] sm:$0xff] %vm1000, %v999
    // Predicated region
    $region46: #{actor_critic_forward.1} parent=1 // pred_check
      _
    $region47: #{actor_critic_forward.1} parent=1 // pred_check_branch
      %1003 = sbr.rel (0) target = $region49
    $region48: #{actor_critic_forward.1} parent=1 // pred_region
      _
    $region49: #{actor_critic_forward.1} parent=1 // pred_fallthru
      _
    // Predicated region
    $region50: #{actor_critic_forward.1} parent=1 // pred_check
      _
    $region51: #{actor_critic_forward.1} parent=1 // pred_check_branch
      %1005 = sbr.rel (0) target = $region53
    $region52: #{actor_critic_forward.1} parent=1 // pred_region
      _
    $region53: #{actor_critic_forward.1} parent=1 // pred_fallthru
      _
    %1006 = vsyncpa [#allocation3], 1
    %1007 = vsyncpa [#allocation5], 1

</llo_original>
